<compile_context>
chip_gen: v6e
topology: v6e:2x2x1
jax: 0.10.0
libtpu: 0.0.40
codegen_flags: <defaults>
</compile_context>

<pallas_src>
import functools

import jax
import jax.numpy as jnp
from jax.experimental import pallas as pl
from jax.experimental.pallas import tpu as pltpu

LANE = 128
SUBLANE = 8

_TASKS = ("oce", "ocnli", "tnews")
_NUM_LABELS = {"oce": 7, "ocnli": 3, "tnews": 15}
_TASK_IDX = {t: i for i, t in enumerate(_TASKS)}


def _gated_head_kernel(x_ref, gw_ref, gb_ref, cw_ref, cb_ref, out_ref, acc_ref):
    """One (head, K-tile) grid step of the fused gate + classifier head.

    x_ref  : (Bp, H)   bf16 pooled activations (resident across the grid)
    gw_ref : (H, TK)   bf16 gate-weight column tile (in x out layout)
    gb_ref : (1, TK)   f32  gate-bias tile
    cw_ref : (TK, Lp)  bf16 classifier-weight row tile (in x out layout)
    cb_ref : (1, Lp)   f32  classifier bias (padded)
    out_ref: (Bp, Lp)  f32  logits for this head (padded lanes)
    acc_ref: (Bp, Lp)  f32  VMEM accumulator
    """
    k = pl.program_id(1)
    nk = pl.num_programs(1)
    tk = gw_ref.shape[1]

    @pl.when(k == 0)
    def _init():
        acc_ref[...] = jnp.zeros_like(acc_ref)

    # Gate columns of this K tile: sigmoid(x @ Wg[:, tile] + bg[tile]).
    g = jnp.dot(x_ref[...], gw_ref[...],
                preferred_element_type=jnp.float32)           # (Bp, TK) f32
    gate = jax.nn.sigmoid(g + gb_ref[...])                    # (Bp, TK) f32

    start = pl.multiple_of(k * tk, tk)
    xc = x_ref[:, pl.ds(start, tk)]                           # (Bp, TK) bf16
    gated = (xc * gate).astype(cw_ref.dtype)                  # f32 mul -> bf16
    acc_ref[...] += jnp.dot(gated, cw_ref[...],
                            preferred_element_type=jnp.float32)

    @pl.when(k == nk - 1)
    def _finalize():
        out_ref[...] = acc_ref[...] + cb_ref[...]


def _pick_tk(H, max_tk=512):
    """Largest multiple of 128 that divides H, capped at max_tk."""
    if H % LANE != 0:
        return H
    tk = LANE
    while tk * 2 <= max_tk and H % (tk * 2) == 0:
        tk *= 2
    return tk


@functools.partial(jax.jit, static_argnames=("n_heads", "head_offset", "tk"))
def _gated_heads(pooled, gw_s, gb_s, cw_s, cb_s, *, n_heads, head_offset, tk):
    """Run heads [head_offset, head_offset + n_heads) over the whole batch.

    Returns (n_heads, B, Lp) f32 logits (lane-padded).
    """
    B, H = pooled.shape
    Lp = cw_s.shape[-1]
    assert H % tk == 0

    # One-time activation cast (halves x DMA bytes, removes in-kernel casts).
    pooled = pooled.astype(jnp.bfloat16)

    # Keep the batch block sublane-dense.
    Bp = ((B + SUBLANE - 1) // SUBLANE) * SUBLANE
    if Bp != B:
        pooled = jnp.pad(pooled, ((0, Bp - B), (0, 0)))

    nk = H // tk

    # Explicit VMEM budget: double-buffered weight tiles + x / out / acc.
    need = (2 * (H * tk + tk * Lp) * 2          # bf16 weight double-buffers
            + 2 * Bp * H * 2                    # bf16 x (double-buffered)
            + 3 * Bp * Lp * 4                   # out (x2) + accumulator
            + 4 * (tk + Lp) * 4)                # bias tiles
    vmem_limit = int(min(48 * 1024 * 1024, max(16 * 1024 * 1024, 3 * need)))

    out = pl.pallas_call(
        _gated_head_kernel,
        out_shape=jax.ShapeDtypeStruct((n_heads, Bp, Lp), jnp.float32),
        grid=(n_heads, nk),
        in_specs=[
            pl.BlockSpec((Bp, H), lambda t, k: (0, 0)),
            pl.BlockSpec((None, H, tk), lambda t, k: (t + head_offset, 0, k)),
            pl.BlockSpec((None, 1, tk), lambda t, k: (t + head_offset, 0, k)),
            pl.BlockSpec((None, tk, Lp), lambda t, k: (t + head_offset, k, 0)),
            pl.BlockSpec((None, 1, Lp), lambda t, k: (t + head_offset, 0, 0)),
        ],
        out_specs=pl.BlockSpec((None, Bp, Lp), lambda t, k: (t, 0, 0)),
        scratch_shapes=[pltpu.VMEM((Bp, Lp), jnp.float32)],
        compiler_params=pltpu.CompilerParams(
            dimension_semantics=("parallel", "arbitrary"),
            vmem_limit_bytes=vmem_limit,
        ),
    )(pooled, gw_s, gb_s, cw_s, cb_s)

    return out[:, :B, :]


def make_params(hidden_size, key):
    """Deterministic synthetic parameters matching GateOut.__init__ shapes.

    Linear weights are stored transposed as (in_features, out_features);
    biases are zero (BaseModel._init_weights zeroes Linear biases).
    """
    ks = jax.random.split(key, 6)
    H = hidden_size
    scale = 0.02
    return {
        "gate_oce_w": jax.random.normal(ks[0], (H, H), jnp.float32) * scale,
        "gate_ocnli_w": jax.random.normal(ks[1], (H, H), jnp.float32) * scale,
        "gate_tnews_w": jax.random.normal(ks[2], (H, H), jnp.float32) * scale,
        "gate_oce_b": jnp.zeros((H,), jnp.float32),
        "gate_ocnli_b": jnp.zeros((H,), jnp.float32),
        "gate_tnews_b": jnp.zeros((H,), jnp.float32),
        "cls_oce_w": jax.random.normal(ks[3], (H, 7), jnp.float32) * scale,
        "cls_ocnli_w": jax.random.normal(ks[4], (H, 3), jnp.float32) * scale,
        "cls_tnews_w": jax.random.normal(ks[5], (H, 15), jnp.float32) * scale,
        "cls_oce_b": jnp.zeros((7,), jnp.float32),
        "cls_ocnli_b": jnp.zeros((3,), jnp.float32),
        "cls_tnews_b": jnp.zeros((15,), jnp.float32),
    }


def prepare_params(params, hidden_size):
    """One-time packing of the GateOut head parameters for the fused kernel.

    Stacks the 3 heads, pads classifier outputs to a lane-dense Lp, casts
    weights to bf16.  Done once, not per forward call.
    """
    H = hidden_size
    Lmax = max(_NUM_LABELS.values())
    Lp = max(LANE, pl.cdiv(Lmax, LANE) * LANE)

    gw = jnp.stack([params[f"gate_{t}_w"] for t in _TASKS]).astype(jnp.bfloat16)
    gb = jnp.stack(
        [params[f"gate_{t}_b"].reshape(1, H) for t in _TASKS]).astype(jnp.float32)

    cw_l, cb_l = [], []
    for t in _TASKS:
        L = _NUM_LABELS[t]
        cw_l.append(jnp.zeros((H, Lp), jnp.float32).at[:, :L].set(params[f"cls_{t}_w"]))
        cb_l.append(jnp.zeros((1, Lp), jnp.float32).at[0, :L].set(params[f"cls_{t}_b"]))
    cw = jnp.stack(cw_l).astype(jnp.bfloat16)
    cb = jnp.stack(cb_l).astype(jnp.float32)

    return {"gw": gw, "gb": gb, "cw": cw, "cb": cb, "H": H, "Lp": Lp}


def gate_out_forward(pooled_out, prep, task, *, tk=None):
    """Mirrors GateOut.forward after the BERT pooled output (eval mode).

    - task is a string        -> (B, num_labels) logits
    - task is a list (len==B) -> list of per-row logits (lengths vary by task)
    """
    if tk is None:
        tk = _pick_tk(prep["H"])
    args = (pooled_out, prep["gw"], prep["gb"], prep["cw"], prep["cb"])

    if not isinstance(task, list):
        ti = _TASK_IDX[task]
        out = _gated_heads(*args, n_heads=1, head_offset=ti, tk=tk)
        return out[0, :, : _NUM_LABELS[task]]

    # List path: ONE fused call computes every head for the whole batch
    # (no per-row B=1 launches, no repeated weight streaming), then the
    # requested head is picked per row (ragged per-task lengths).
    out = _gated_heads(*args, n_heads=len(_TASKS), head_offset=0, tk=tk)
    return [out[_TASK_IDX[t], i, : _NUM_LABELS[t]] for i, t in enumerate(task)]


def _reference_head(pooled, prep, tidx, num_labels):
    """Pure-JAX reference matching kernel numerics (bf16 activations/weights
    for the matmuls, f32 gate/accumulation)."""
    xb = pooled.astype(jnp.bfloat16)
    xf = xb.astype(jnp.float32)
    gw = prep["gw"][tidx].astype(jnp.float32)
    gb = prep["gb"][tidx]
    cw = prep["cw"][tidx].astype(jnp.float32)
    cb = prep["cb"][tidx]
    gate = jax.nn.sigmoid(xf @ gw + gb)
    gated = (xf * gate).astype(jnp.bfloat16).astype(jnp.float32)
    return (gated @ cw + cb)[:, :num_labels]


if __name__ == "__main__":
    key = jax.random.PRNGKey(0)
    k_pool, k_param = jax.random.split(key)

    B, H = 8, 256          # small stand-in for (batch, bert hidden_size)
    TK = 128               # forces a 2-step K reduction (exercises accumulator)
    pooled_out = jax.random.normal(k_pool, (B, H), jnp.float32)

    params = make_params(H, k_param)
    prep = prepare_params(params, H)

    # --- single-task path -------------------------------------------------
    logits_oce = gate_out_forward(pooled_out, prep, "oce", tk=TK)
    jax.block_until_ready(logits_oce)
    assert logits_oce.shape == (B, 7)
    ref_oce = _reference_head(pooled_out, prep, _TASK_IDX["oce"], 7)
    assert jnp.allclose(logits_oce, ref_oce, atol=1e-2, rtol=1e-2), (
        float(jnp.max(jnp.abs(logits_oce - ref_oce))))

    logits_tnews = gate_out_forward(pooled_out, prep, "tnews", tk=TK)
    jax.block_until_ready(logits_tnews)
    assert logits_tnews.shape == (B, 15)
    ref_tnews = _reference_head(pooled_out, prep, _TASK_IDX["tnews"], 15)
    assert jnp.allclose(logits_tnews, ref_tnews, atol=1e-2, rtol=1e-2)

    # --- list-of-tasks path (per-row head selection) -----------------------
    tasks = ["oce", "ocnli", "tnews", "oce", "ocnli", "tnews", "oce", "tnews"]
    per_row = gate_out_forward(pooled_out, prep, tasks, tk=TK)
    jax.block_until_ready(per_row)
    for i, t in enumerate(tasks):
        L = _NUM_LABELS[t]
        assert per_row[i].shape == (L,)
        ref_row = _reference_head(pooled_out[i:i + 1], prep, _TASK_IDX[t], L)[0]
        assert jnp.allclose(per_row[i], ref_row, atol=1e-2, rtol=1e-2)

    print("KERNEL_OK")
</pallas_src>

<mosaic_0001>
module attributes {stable_mosaic.version = 11 : i64} {
  func.func @_gated_head_kernel(%arg0: i32, %arg1: i32, %arg2: memref<8x256xbf16, #tpu.memory_space<vmem>>, %arg3: memref<1x256x128xbf16, #tpu.memory_space<vmem>>, %arg4: memref<1x1x128xf32, #tpu.memory_space<vmem>>, %arg5: memref<1x128x128xbf16, #tpu.memory_space<vmem>>, %arg6: memref<1x1x128xf32, #tpu.memory_space<vmem>>, %arg7: memref<1x8x128xf32, #tpu.memory_space<vmem>>, %arg8: memref<8x128xf32, #tpu.memory_space<vmem>>) attributes {dimension_semantics = [#tpu.dimension_semantics<parallel>, #tpu.dimension_semantics<arbitrary>], iteration_bounds = array<i64: 1, 2>, scalar_prefetch = 0 : i64, scratch_operands = 1 : i64, tpu.core_type = #tpu.core_type<tc>, window_params = [{pipeline_mode = #tpu.pipeline_mode<synchronous>, transform_indices = @transform_0, window_bounds = array<i64: 8, 256>}, {transform_indices = @transform_1, window_bounds = array<i64: 1, 256, 128>}, {transform_indices = @transform_2, window_bounds = array<i64: 1, 1, 128>}, {transform_indices = @transform_3, window_bounds = array<i64: 1, 128, 128>}, {transform_indices = @transform_4, window_bounds = array<i64: 1, 1, 128>}, {transform_indices = @transform_5, window_bounds = array<i64: 1, 8, 128>}]} {
    %c0_i32 = arith.constant 0 : i32
    %0 = arith.cmpi eq, %arg1, %c0_i32 : i32
    %1 = arith.extui %0 : i1 to i32
    %c0_i32_0 = arith.constant 0 : i32
    %2 = arith.cmpi ne, %1, %c0_i32_0 : i32
    scf.if %2 {
      %cst_19 = arith.constant 0.000000e+00 : f32
      %32 = vector.broadcast %cst_19 : f32 to vector<8x128xf32>
      %c0_20 = arith.constant 0 : index
      %c0_21 = arith.constant 0 : index
      %33 = vector.load %arg8[%c0_20, %c0_21] : memref<8x128xf32, #tpu.memory_space<vmem>>, vector<8x128xf32>
      tpu.vector_store %arg8[%c0_20, %c0_21], %32 {strides = array<i32>} : memref<8x128xf32, #tpu.memory_space<vmem>>, vector<8x128xf32>,
    } else {
    }
    %c0 = arith.constant 0 : index
    %c0_1 = arith.constant 0 : index
    %3 = vector.load %arg2[%c0, %c0_1] : memref<8x256xbf16, #tpu.memory_space<vmem>>, vector<8x256xbf16>
    %c0_2 = arith.constant 0 : index
    %c0_3 = arith.constant 0 : index
    %c0_4 = arith.constant 0 : index
    %4 = vector.load %arg3[%c0_2, %c0_3, %c0_4] : memref<1x256x128xbf16, #tpu.memory_space<vmem>>, vector<1x256x128xbf16>
    %5 = vector.shape_cast %4 : vector<1x256x128xbf16> to vector<256x128xbf16>
    %cst = arith.constant dense<0.000000e+00> : vector<8x128xf32>
    %6 = tpu.matmul %3, %5, %cst {dimension_numbers = #tpu.dot_dimension_numbers<[1], [0], [0], [1], [0, 0, 1, 1], [], []>} : vector<8x256xbf16>, vector<256x128xbf16>, vector<8x128xf32> -> vector<8x128xf32>
    %c0_5 = arith.constant 0 : index
    %c0_6 = arith.constant 0 : index
    %c0_7 = arith.constant 0 : index
    %7 = vector.load %arg4[%c0_5, %c0_6, %c0_7] : memref<1x1x128xf32, #tpu.memory_space<vmem>>, vector<1x1x128xf32>
    %8 = vector.shape_cast %7 : vector<1x1x128xf32> to vector<1x128xf32>
    %9 = vector.broadcast %8 : vector<1x128xf32> to vector<8x128xf32>
    %10 = arith.addf %6, %9 : vector<8x128xf32>
    %11 = arith.negf %10 : vector<8x128xf32>
    %12 = math.exp %11 : vector<8x128xf32>
    %cst_8 = arith.constant 1.000000e+00 : f32
    %13 = vector.broadcast %cst_8 : f32 to vector<8x128xf32>
    %14 = arith.addf %13, %12 : vector<8x128xf32>
    %15 = arith.divf %13, %14 : vector<8x128xf32>
    %c128_i32 = arith.constant 128 : i32
    %16 = arith.muli %arg1, %c128_i32 : i32
    %17 = tpu.assume_multiple %16, 128 : i32
    %c0_9 = arith.constant 0 : index
    %18 = arith.index_cast %17 : i32 to index
    %19 = vector.load %arg2[%c0_9, %18] : memref<8x256xbf16, #tpu.memory_space<vmem>>, vector<8x128xbf16>
    %20 = arith.extf %19 : vector<8x128xbf16> to vector<8x128xf32>
    %21 = arith.mulf %20, %15 : vector<8x128xf32>
    %22 = arith.truncf %21 : vector<8x128xf32> to vector<8x128xbf16>
    %c0_10 = arith.constant 0 : index
    %c0_11 = arith.constant 0 : index
    %23 = vector.load %arg8[%c0_10, %c0_11] : memref<8x128xf32, #tpu.memory_space<vmem>>, vector<8x128xf32>
    %c0_12 = arith.constant 0 : index
    %c0_13 = arith.constant 0 : index
    %c0_14 = arith.constant 0 : index
    %24 = vector.load %arg5[%c0_12, %c0_13, %c0_14] : memref<1x128x128xbf16, #tpu.memory_space<vmem>>, vector<1x128x128xbf16>
    %25 = vector.shape_cast %24 : vector<1x128x128xbf16> to vector<128x128xbf16>
    %cst_15 = arith.constant dense<0.000000e+00> : vector<8x128xf32>
    %26 = tpu.matmul %22, %25, %cst_15 {dimension_numbers = #tpu.dot_dimension_numbers<[1], [0], [0], [1], [0, 0, 1, 1], [], []>} : vector<8x128xbf16>, vector<128x128xbf16>, vector<8x128xf32> -> vector<8x128xf32>
    %27 = arith.addf %23, %26 : vector<8x128xf32>
    %c0_16 = arith.constant 0 : index
    %c0_17 = arith.constant 0 : index
    %28 = vector.load %arg8[%c0_16, %c0_17] : memref<8x128xf32, #tpu.memory_space<vmem>>, vector<8x128xf32>
    tpu.vector_store %arg8[%c0_16, %c0_17], %27 {strides = array<i32>} : memref<8x128xf32, #tpu.memory_space<vmem>>, vector<8x128xf32>,
    %c1_i32 = arith.constant 1 : i32
    %29 = arith.cmpi eq, %arg1, %c1_i32 : i32
    %30 = arith.extui %29 : i1 to i32
    %c0_i32_18 = arith.constant 0 : i32
    %31 = arith.cmpi ne, %30, %c0_i32_18 : i32
    scf.if %31 {
      %c0_19 = arith.constant 0 : index
      %c0_20 = arith.constant 0 : index
      %32 = vector.load %arg8[%c0_19, %c0_20] : memref<8x128xf32, #tpu.memory_space<vmem>>, vector<8x128xf32>
      %c0_21 = arith.constant 0 : index
      %c0_22 = arith.constant 0 : index
      %c0_23 = arith.constant 0 : index
      %33 = vector.load %arg6[%c0_21, %c0_22, %c0_23] : memref<1x1x128xf32, #tpu.memory_space<vmem>>, vector<1x1x128xf32>
      %34 = vector.shape_cast %33 : vector<1x1x128xf32> to vector<1x128xf32>
      %35 = vector.broadcast %34 : vector<1x128xf32> to vector<8x128xf32>
      %36 = arith.addf %32, %35 : vector<8x128xf32>
      %c0_24 = arith.constant 0 : index
      %c0_25 = arith.constant 0 : index
      %c0_26 = arith.constant 0 : index
      %37 = vector.load %arg7[%c0_24, %c0_25, %c0_26] : memref<1x8x128xf32, #tpu.memory_space<vmem>>, vector<1x8x128xf32>
      %38 = vector.shape_cast %37 : vector<1x8x128xf32> to vector<8x128xf32>
      %39 = vector.shape_cast %36 : vector<8x128xf32> to vector<1x8x128xf32>
      tpu.vector_store %arg7[%c0_24, %c0_25, %c0_26], %39 {strides = array<i32>} : memref<1x8x128xf32, #tpu.memory_space<vmem>>, vector<1x8x128xf32>,
    } else {
    }
    return
  }
  func.func @transform_0(%arg0: i32, %arg1: i32) -> (i32, i32) {
    %c0_i32 = arith.constant 0 : i32
    %c0_i32_0 = arith.constant 0 : i32
    %c0_i32_1 = arith.constant 0 : i32
    return %c0_i32, %c0_i32_0 : i32, i32
  }
  func.func @transform_1(%arg0: i32, %arg1: i32) -> (i32, i32, i32) {
    %c0_i32 = arith.constant 0 : i32
    %0 = arith.addi %arg0, %c0_i32 : i32
    %c0_i32_0 = arith.constant 0 : i32
    %c0_i32_1 = arith.constant 0 : i32
    return %0, %c0_i32_0, %arg1 : i32, i32, i32
  }
  func.func @transform_2(%arg0: i32, %arg1: i32) -> (i32, i32, i32) {
    %c0_i32 = arith.constant 0 : i32
    %0 = arith.addi %arg0, %c0_i32 : i32
    %c0_i32_0 = arith.constant 0 : i32
    %c0_i32_1 = arith.constant 0 : i32
    return %0, %c0_i32_0, %arg1 : i32, i32, i32
  }
  func.func @transform_3(%arg0: i32, %arg1: i32) -> (i32, i32, i32) {
    %c0_i32 = arith.constant 0 : i32
    %0 = arith.addi %arg0, %c0_i32 : i32
    %c0_i32_0 = arith.constant 0 : i32
    %c0_i32_1 = arith.constant 0 : i32
    return %0, %arg1, %c0_i32_0 : i32, i32, i32
  }
  func.func @transform_4(%arg0: i32, %arg1: i32) -> (i32, i32, i32) {
    %c0_i32 = arith.constant 0 : i32
    %0 = arith.addi %arg0, %c0_i32 : i32
    %c0_i32_0 = arith.constant 0 : i32
    %c0_i32_1 = arith.constant 0 : i32
    %c0_i32_2 = arith.constant 0 : i32
    return %0, %c0_i32_0, %c0_i32_1 : i32, i32, i32
  }
  func.func @transform_5(%arg0: i32, %arg1: i32) -> (i32, i32, i32) {
    %c0_i32 = arith.constant 0 : i32
    %c0_i32_0 = arith.constant 0 : i32
    %c0_i32_1 = arith.constant 0 : i32
    return %arg0, %c0_i32, %c0_i32_0 : i32, i32, i32
  }
}

</mosaic_0001>

<llo_original>
// kernel: _gated_heads.1
$region0: #{_gated_heads.1}
  #allocation0 [shape = 'u32[]', space=smem, size = 0x4, offset = 0x4, fixed_abs, tag = 'smem constant byte address 0x4 - core index']
  #allocation1 [shape = 'u32[144,128]{1,0:T(1,128)}', space=vmem, size = 0x12000, scoped, tag = 'internal scratch']
  #allocation2 [shape = 'f32[8,128]{1,0:T(8,128)}', space=vmem, size = 0x1000, scoped, tag = 'scratch operand']
  %s0 = inlined_call_operand.vmem [shape: bf16[8,256], index: 0, kind: input, shape index: {}]
  %s1 = inlined_call_operand.hbm [shape: bf16[3,256,256], index: 1, kind: input, shape index: {}]
  %s2 = inlined_call_operand.vmem [shape: f32[3,1,256], index: 2, kind: input, shape index: {}]
  %s3 = inlined_call_operand.hbm [shape: bf16[3,256,128], index: 3, kind: input, shape index: {}]
  %s4 = inlined_call_operand.vmem [shape: f32[3,1,128], index: 4, kind: input, shape index: {}]
  %s5 = inlined_call_operand.hbm [shape: f32[1,8,128], index: 5, kind: output, shape index: {}]
  %s6 = sld [smem:[#allocation0]]
  $region69: #{_gated_heads.1} parent=0
    _
  %s8 = ssub.s32 1, %s6
  %s9 = scalar_select 0, %s8, %s6
  $region1: #{_gated_heads.1} parent=0
    #allocation3 [shape = 'u8[131072]{0}', space=vmem, size = 0x20000, scoped, tag = 'input window, operand 1']
    #allocation4 [shape = 's32[2]{0}', space=sflag, size = 0x8, scoped, tag = 'scoped memory for _gated_heads.1']
    #allocation5 [shape = 's32[2]{0}', space=sflag, size = 0x8, scoped, tag = 'scoped memory for _gated_heads.1']
    #allocation6 [shape = 'u8[65536]{0}', space=vmem, size = 0x10000, scoped, tag = 'input window, operand 3']
    #allocation7 [shape = 's32[2]{0}', space=sflag, size = 0x8, scoped, tag = 'scoped memory for _gated_heads.1']
    #allocation8 [shape = 'u8[4096]{0}', space=vmem, size = 0x1000, scoped, tag = 'output window, operand 0, single buffered']
    %10 = vsyncpa [#allocation4], 0
    %s11 = scalar_lea.sflag [#allocation4], 1
    %12 = vsyncpa %s11, 0
    %13 = vsyncpa [#allocation7], 0
    %s14 = scalar_lea.sflag [#allocation7], 1
    %15 = vsyncpa %s14, 0
    %16 = vsyncpa [#allocation5], 0
    loop: start=0, step=1, limit=4
    $region2: #{_gated_heads.1} parent=1 // loop_pre_header
      _
    $region3: #{_gated_heads.1} parent=1 // loop_header
      %s18 = sphi 0, %s22
      %p19 = scmp.ge.s32.totalorder %s18, 4
      %s25 = sphi 0, %s37
      %s26 = sphi 0, %s33
      %s27 = sphi 0, %s25
      %s28 = sphi 0, %s26
      %s29 = sphi 0, %s27
      %s30 = sphi 0, %s28
      %s38 = sphi 0, %s38
      %s40 = sphi 0, %s38
      %s41 = sphi 0, %s40
      %s55 = sphi 0, %s41
      %s63 = sphi 0, %s65
      %s66 = sphi 0, %s63
      %s67 = sphi 0, %s66
      %s83 = sphi 0, %s67
      %s91 = sphi 0, %s93
      %s94 = sphi 0, %s91
      %s95 = sphi 0, %s94
      %s111 = sphi 0, %s95
      %s119 = sphi 0, %s121
      %s122 = sphi 0, %s119
      %s123 = sphi 0, %s122
      %s139 = sphi 0, %s123
      %s145 = sphi 0, %s147
      %s148 = sphi 0, %s145
      %s149 = sphi 0, %s148
      %s165 = sphi 0, %s149
      %s171 = sphi 0, %s173
      %s174 = sphi 0, %s171
      %s175 = sphi 0, %s174
      %s191 = sphi 0, %s175
    $region4: #{_gated_heads.1} parent=1 // loop_header_branch
      %21 = sbr.rel (%p19) target = $region8
    $region5: #{_gated_heads.1} parent=1 // loop_body
      %s23 = ssub.s32 %s18, 1
      %s24 = ssub.s32 %s18, 2
      %s31 = sadd.s32 1, %s26
      %p32 = scmp.ge.s32.totalorder %s31, 2
      %s33 = scalar_select %p32, 0, %s31
      %s34 = sadd.s32 1, %s25
      %s35 = scalar_select %p32, %s34, %s25
      %p36 = scmp.ge.s32.totalorder %s35, 1
      %s37 = scalar_select %p36, 0, %s35
      %s39 = sadd.s32 %s38, 1
      %p42 = scmp.eq.s32.totalorder %s18, 1
      %p43 = scmp.ne.s32.totalorder %s38, %s40
      %p44 = scmp.eq.s32.totalorder %s18, 0
      %p45 = por %p43, %p44
      %p46 = scmp.ne.s32.totalorder %s38, %s40
      %p47 = scmp.eq.s32.totalorder %s23, 1
      %p48 = por %p46, %p47
      %p49 = scmp.ne.s32.totalorder %s40, %s41
      %p50 = scmp.eq.s32.totalorder %s23, 0
      %p51 = por %p49, %p50
      %p52 = scmp.ne.s32.totalorder %s40, %s41
      %p53 = scmp.eq.s32.totalorder %s24, 1
      %p54 = por %p52, %p53
      %p56 = scmp.ne.s32.totalorder %s41, %s55
      %p57 = scmp.eq.s32.totalorder %s24, 0
      %p58 = por %p56, %p57
      %s59 = ssub.s32 %s25, %s37
      %s60 = ssub.s32 %s26, %s33
      %s61 = sor.u32 %s59, %s60
      %p62 = scmp.eq.s32.totalorder %s61, 0
      %s64 = sadd.s32 %s63, 1
      %s65 = scalar_select %p62, %s63, %s64
      %p68 = pneg %p62
      %p69 = scmp.eq.s32.totalorder %s18, 1
      %p70 = por %p68, %p69
      %p71 = scmp.ne.s32.totalorder %s63, %s66
      %p72 = scmp.eq.s32.totalorder %s18, 0
      %p73 = por %p71, %p72
      %p74 = scmp.ne.s32.totalorder %s63, %s66
      %p75 = scmp.eq.s32.totalorder %s23, 1
      %p76 = por %p74, %p75
      %p77 = scmp.ne.s32.totalorder %s66, %s67
      %p78 = scmp.eq.s32.totalorder %s23, 0
      %p79 = por %p77, %p78
      %p80 = scmp.ne.s32.totalorder %s66, %s67
      %p81 = scmp.eq.s32.totalorder %s24, 1
      %p82 = por %p80, %p81
      %p84 = scmp.ne.s32.totalorder %s67, %s83
      %p85 = scmp.eq.s32.totalorder %s24, 0
      %p86 = por %p84, %p85
      %s87 = ssub.s32 %s25, %s37
      %s88 = ssub.s32 %s26, %s33
      %s89 = sor.u32 %s87, %s88
      %p90 = scmp.eq.s32.totalorder %s89, 0
      %s92 = sadd.s32 %s91, 1
      %s93 = scalar_select %p90, %s91, %s92
      %p96 = pneg %p90
      %p97 = scmp.eq.s32.totalorder %s18, 1
      %p98 = por %p96, %p97
      %p99 = scmp.ne.s32.totalorder %s91, %s94
      %p100 = scmp.eq.s32.totalorder %s18, 0
      %p101 = por %p99, %p100
      %p102 = scmp.ne.s32.totalorder %s91, %s94
      %p103 = scmp.eq.s32.totalorder %s23, 1
      %p104 = por %p102, %p103
      %p105 = scmp.ne.s32.totalorder %s94, %s95
      %p106 = scmp.eq.s32.totalorder %s23, 0
      %p107 = por %p105, %p106
      %p108 = scmp.ne.s32.totalorder %s94, %s95
      %p109 = scmp.eq.s32.totalorder %s24, 1
      %p110 = por %p108, %p109
      %p112 = scmp.ne.s32.totalorder %s95, %s111
      %p113 = scmp.eq.s32.totalorder %s24, 0
      %p114 = por %p112, %p113
      %s115 = ssub.s32 %s25, %s37
      %s116 = ssub.s32 %s26, %s33
      %s117 = sor.u32 %s115, %s116
      %p118 = scmp.eq.s32.totalorder %s117, 0
      %s120 = sadd.s32 %s119, 1
      %s121 = scalar_select %p118, %s119, %s120
      %p124 = pneg %p118
      %p125 = scmp.eq.s32.totalorder %s18, 1
      %p126 = por %p124, %p125
      %p127 = scmp.ne.s32.totalorder %s119, %s122
      %p128 = scmp.eq.s32.totalorder %s18, 0
      %p129 = por %p127, %p128
      %p130 = scmp.ne.s32.totalorder %s119, %s122
      %p131 = scmp.eq.s32.totalorder %s23, 1
      %p132 = por %p130, %p131
      %p133 = scmp.ne.s32.totalorder %s122, %s123
      %p134 = scmp.eq.s32.totalorder %s23, 0
      %p135 = por %p133, %p134
      %p136 = scmp.ne.s32.totalorder %s122, %s123
      %p137 = scmp.eq.s32.totalorder %s24, 1
      %p138 = por %p136, %p137
      %p140 = scmp.ne.s32.totalorder %s123, %s139
      %p141 = scmp.eq.s32.totalorder %s24, 0
      %p142 = por %p140, %p141
      %s143 = ssub.s32 %s25, %s37
      %p144 = scmp.eq.s32.totalorder %s143, 0
      %s146 = sadd.s32 %s145, 1
      %s147 = scalar_select %p144, %s145, %s146
      %p150 = pneg %p144
      %p151 = scmp.eq.s32.totalorder %s18, 1
      %p152 = por %p150, %p151
      %p153 = scmp.ne.s32.totalorder %s145, %s148
      %p154 = scmp.eq.s32.totalorder %s18, 0
      %p155 = por %p153, %p154
      %p156 = scmp.ne.s32.totalorder %s145, %s148
      %p157 = scmp.eq.s32.totalorder %s23, 1
      %p158 = por %p156, %p157
      %p159 = scmp.ne.s32.totalorder %s148, %s149
      %p160 = scmp.eq.s32.totalorder %s23, 0
      %p161 = por %p159, %p160
      %p162 = scmp.ne.s32.totalorder %s148, %s149
      %p163 = scmp.eq.s32.totalorder %s24, 1
      %p164 = por %p162, %p163
      %p166 = scmp.ne.s32.totalorder %s149, %s165
      %p167 = scmp.eq.s32.totalorder %s24, 0
      %p168 = por %p166, %p167
      %s169 = ssub.s32 %s25, %s37
      %p170 = scmp.eq.s32.totalorder %s169, 0
      %s172 = sadd.s32 %s171, 1
      %s173 = scalar_select %p170, %s171, %s172
      %p176 = pneg %p170
      %p177 = scmp.eq.s32.totalorder %s18, 1
      %p178 = por %p176, %p177
      %p179 = scmp.ne.s32.totalorder %s171, %s174
      %p180 = scmp.eq.s32.totalorder %s18, 0
      %p181 = por %p179, %p180
      %p182 = scmp.ne.s32.totalorder %s171, %s174
      %p183 = scmp.eq.s32.totalorder %s23, 1
      %p184 = por %p182, %p183
      %p185 = scmp.ne.s32.totalorder %s174, %s175
      %p186 = scmp.eq.s32.totalorder %s23, 0
      %p187 = por %p185, %p186
      %p188 = scmp.ne.s32.totalorder %s174, %s175
      %p189 = scmp.eq.s32.totalorder %s24, 1
      %p190 = por %p188, %p189
      %p192 = scmp.ne.s32.totalorder %s175, %s191
      %p193 = scmp.eq.s32.totalorder %s24, 0
      %p194 = por %p192, %p193
      %p195 = scmp.le.s32.totalorder 1, %s18
      %p196 = scmp.lt.s32.totalorder %s18, 3
      %p197 = pnand %p195, %p196
      %p198 = pneg %p197
      // Predicated region
      $region9: #{_gated_heads.1} parent=5 // pred_check
        _
      $region10: #{_gated_heads.1} parent=5 // pred_check_branch
        %200 = sbr.rel (%p197) target = $region12
      $region11: #{_gated_heads.1} parent=5 // pred_region
        %s201 = ssub.s32 %s18, 1
        // Predicated region
        $region13: #{_gated_heads.1} parent=11 // pred_check
          %p202 = pneg %p51
        $region14: #{_gated_heads.1} parent=11 // pred_check_branch
          %204 = sbr.rel (%p202) target = $region16
        $region15: #{_gated_heads.1} parent=11 // pred_region
          _
        $region16: #{_gated_heads.1} parent=11 // pred_fallthru
          _
        // Predicated region
        $region17: #{_gated_heads.1} parent=11 // pred_check
          %p205 = pneg %p161
        $region18: #{_gated_heads.1} parent=11 // pred_check_branch
          %207 = sbr.rel (%p205) target = $region20
        $region19: #{_gated_heads.1} parent=11 // pred_region
          %p208 = scmp.lt.s32.totalorder %s27, 2
          %s209 = scalar_select %p208, %s27, 2
          %s210 = scalar_lea.vmem %s4, %s209
        $region20: #{_gated_heads.1} parent=11 // pred_fallthru
          _
      $region12: #{_gated_heads.1} parent=5 // pred_fallthru
        _
      %p211 = scmp.lt.s32.totalorder %s18, 2
      // Predicated region
      $region21: #{_gated_heads.1} parent=5 // pred_check
        %p212 = pneg %p211
      $region22: #{_gated_heads.1} parent=5 // pred_check_branch
        %214 = sbr.rel (%p212) target = $region24
      $region23: #{_gated_heads.1} parent=5 // pred_region
        // Predicated region
        $region25: #{_gated_heads.1} parent=23 // pred_check
          %p215 = pneg %p73
        $region26: #{_gated_heads.1} parent=23 // pred_check_branch
          %217 = sbr.rel (%p215) target = $region28
        $region27: #{_gated_heads.1} parent=23 // pred_region
          %s218 = sand.u32 %s63, 1
          %s219 = scalar_lea.sflag [#allocation4], %s218
          %s220 = sand.u32 %s63, 1
          %s221 = smul.addr %s220, 128
          %s222 = scalar_lea.vmem [#allocation3], %s221
          %s224 = ssub.s32 2048, 2048
          %225 = vsyncadd %s219, %s224
          %s226 = smul.addr %s25, 64
          %s227 = sadd.s32 %s26, %s226
          %s228 = smul.addr %s227, 64
          %s229 = scalar_lea.hbm %s1, %s228
          %s230 = sshll.u32 %s222, 4
          %s231 = int_to_ptr.vmem [resolvable:$true] %s230
          %236 = dma.hbm_to_vmem [thread:$0]  %s229, 2048, %s231, %s219, 128, 64, 4
        $region28: #{_gated_heads.1} parent=23 // pred_fallthru
          _
        // Predicated region
        $region29: #{_gated_heads.1} parent=23 // pred_check
          %p237 = pneg %p101
        $region30: #{_gated_heads.1} parent=23 // pred_check_branch
          %239 = sbr.rel (%p237) target = $region32
        $region31: #{_gated_heads.1} parent=23 // pred_region
          %p240 = scmp.lt.s32.totalorder %s25, 2
          %s241 = scalar_select %p240, %s25, 2
          %p242 = scmp.lt.s32.totalorder %s26, 1
          %s243 = scalar_select %p242, %s26, 1
          %s244 = smul.addr %s241, 2
          %s245 = sadd.s32 %s243, %s244
          %s246 = scalar_lea.vmem %s2, %s245
        $region32: #{_gated_heads.1} parent=23 // pred_fallthru
          _
        // Predicated region
        $region33: #{_gated_heads.1} parent=23 // pred_check
          %p247 = pneg %p129
        $region34: #{_gated_heads.1} parent=23 // pred_check_branch
          %249 = sbr.rel (%p247) target = $region36
        $region35: #{_gated_heads.1} parent=23 // pred_region
          %s250 = sand.u32 %s119, 1
          %s251 = scalar_lea.sflag [#allocation7], %s250
          %s252 = sand.u32 %s119, 1
          %s253 = smul.addr %s252, 64
          %s254 = scalar_lea.vmem [#allocation6], %s253
          %s255 = smul.u32 16, %s26
          %s257 = ssub.s32 1024, 1024
          %258 = vsyncadd %s251, %s257
          %s259 = smul.addr %s25, 32
          %s260 = sadd.s32 %s255, %s259
          %s261 = smul.addr %s260, 64
          %s262 = scalar_lea.hbm %s3, %s261
          %s263 = sshll.u32 %s254, 4
          %s264 = int_to_ptr.vmem [resolvable:$true] %s263
          %269 = dma.hbm_to_vmem [thread:$0]  %s262, 1024, %s264, %s251, 64, 64, 4
        $region36: #{_gated_heads.1} parent=23 // pred_fallthru
          _
      $region24: #{_gated_heads.1} parent=5 // pred_fallthru
        _
      %p270 = scmp.le.s32.totalorder 1, %s18
      %p271 = scmp.lt.s32.totalorder %s18, 3
      %p272 = pnand %p270, %p271
      %p273 = pneg %p272
      // Predicated region
      $region37: #{_gated_heads.1} parent=5 // pred_check
        _
      $region38: #{_gated_heads.1} parent=5 // pred_check_branch
        %275 = sbr.rel (%p272) target = $region40
      $region39: #{_gated_heads.1} parent=5 // pred_region
        %s276 = ssub.s32 %s18, 1
        %s277 = sand.u32 %s66, 1
        %s278 = scalar_lea.sflag [#allocation4], %s277
        %s279 = sand.u32 %s66, 1
        %s280 = smul.addr %s279, 128
        %s281 = scalar_lea.vmem [#allocation3], %s280
        // Predicated region
        $region41: #{_gated_heads.1} parent=39 // pred_check
          %p282 = pneg %p79
        $region42: #{_gated_heads.1} parent=39 // pred_check_branch
          %284 = sbr.rel (%p282) target = $region44
        $region43: #{_gated_heads.1} parent=39 // pred_region
          %285 = dma.done %s278, 2048
        $region44: #{_gated_heads.1} parent=39 // pred_fallthru
          _
        %s286 = sand.u32 %s122, 1
        %s287 = scalar_lea.sflag [#allocation7], %s286
        %s288 = sand.u32 %s122, 1
        %s289 = smul.addr %s288, 64
        %s290 = scalar_lea.vmem [#allocation6], %s289
        // Predicated region
        $region45: #{_gated_heads.1} parent=39 // pred_check
          %p291 = pneg %p135
        $region46: #{_gated_heads.1} parent=39 // pred_check_branch
          %293 = sbr.rel (%p291) target = $region48
        $region47: #{_gated_heads.1} parent=39 // pred_region
          %294 = dma.done %s287, 1024
        $region48: #{_gated_heads.1} parent=39 // pred_fallthru
          _
        %p295 = pneg %p51
        %p296 = pneg %p48
        %s297 = sand.u32 %s66, 1
        %s298 = scalar_lea.sflag [#allocation4], %s297
        %s299 = sand.u32 %s66, 1
        %s300 = smul.addr %s299, 128
        %s301 = scalar_lea.vmem [#allocation3], %s300
        %p302 = pneg %p79
        %p303 = pneg %p76
        %p304 = scmp.lt.s32.totalorder %s27, 2
        %s305 = scalar_select %p304, %s27, 2
        %p306 = scmp.lt.s32.totalorder %s28, 1
        %s307 = scalar_select %p306, %s28, 1
        %s308 = smul.addr %s305, 2
        %s309 = sadd.s32 %s307, %s308
        %s310 = scalar_lea.vmem %s2, %s309
        %p311 = pneg %p107
        %p312 = pneg %p104
        %s313 = sand.u32 %s122, 1
        %s314 = scalar_lea.sflag [#allocation7], %s313
        %s315 = sand.u32 %s122, 1
        %s316 = smul.addr %s315, 64
        %s317 = scalar_lea.vmem [#allocation6], %s316
        %p318 = pneg %p135
        %p319 = pneg %p132
        %p320 = scmp.lt.s32.totalorder %s27, 2
        %s321 = scalar_select %p320, %s27, 2
        %s322 = scalar_lea.vmem %s4, %s321
        %p323 = pneg %p161
        %p324 = pneg %p158
        %p325 = pneg %p187
        %p326 = pneg %p184
        %p327 = scmp.lt.s32.totalorder %s27, 2
        %s328 = scalar_select %p327, %s27, 2
        %p329 = scmp.lt.s32.totalorder %s28, 1
        %s330 = scalar_select %p329, %s28, 1
        %s331 = smul.addr %s328, 2
        %s332 = sadd.s32 %s330, %s331
        %s333 = scalar_lea.vmem %s2, %s332
        %s334 = smul.u32 16, %s28
        %p335 = scmp.lt.s32.totalorder %s27, 2
        %s336 = scalar_select %p335, %s27, 2
        %s337 = scalar_lea.vmem %s4, %s336
        %p339 = scmp.eq.s32.totalorder %s28, 0
        // Predicated region
        $region49: #{_gated_heads.1} parent=39 // pred_check
          %p340 = pneg %p339
        $region50: #{_gated_heads.1} parent=39 // pred_check_branch
          %342 = sbr.rel (%p340) target = $region52
        $region51: #{_gated_heads.1} parent=39 // pred_region
          %343 = vst [vmem:[#allocation2] sm:$0xff] 0.0
        $region52: #{_gated_heads.1} parent=39 // pred_fallthru
          _
        %v344 = vld [vmem:[%s0] sm:$0xff]
        %v345 = vld [vmem:[%s281] sm:$0xf]
        %v346 = vld [vmem:[%s281 + $0x4] sm:$0xf]
        %v347 = vld [vmem:[%s281 + $0x8] sm:$0xf]
        %v348 = vld [vmem:[%s281 + $0xc] sm:$0xf]
        %v349 = vld [vmem:[%s281 + $0x10] sm:$0xf]
        %v350 = vld [vmem:[%s281 + $0x14] sm:$0xf]
        %v351 = vld [vmem:[%s281 + $0x18] sm:$0xf]
        %v352 = vld [vmem:[%s281 + $0x1c] sm:$0xf]
        %v353 = vld [vmem:[%s281 + $0x20] sm:$0xf]
        %v354 = vld [vmem:[%s281 + $0x24] sm:$0xf]
        %v355 = vld [vmem:[%s281 + $0x28] sm:$0xf]
        %v356 = vld [vmem:[%s281 + $0x2c] sm:$0xf]
        %v357 = vld [vmem:[%s281 + $0x30] sm:$0xf]
        %v358 = vld [vmem:[%s281 + $0x34] sm:$0xf]
        %v359 = vld [vmem:[%s281 + $0x38] sm:$0xf]
        %v360 = vld [vmem:[%s281 + $0x3c] sm:$0xf]
        %v361 = vld [vmem:[%s281 + $0x40] sm:$0xf]
        %v362 = vld [vmem:[%s281 + $0x44] sm:$0xf]
        %v363 = vld [vmem:[%s281 + $0x48] sm:$0xf]
        %v364 = vld [vmem:[%s281 + $0x4c] sm:$0xf]
        %v365 = vld [vmem:[%s281 + $0x50] sm:$0xf]
        %v366 = vld [vmem:[%s281 + $0x54] sm:$0xf]
        %v367 = vld [vmem:[%s281 + $0x58] sm:$0xf]
        %v368 = vld [vmem:[%s281 + $0x5c] sm:$0xf]
        %v369 = vld [vmem:[%s281 + $0x60] sm:$0xf]
        %v370 = vld [vmem:[%s281 + $0x64] sm:$0xf]
        %v371 = vld [vmem:[%s281 + $0x68] sm:$0xf]
        %v372 = vld [vmem:[%s281 + $0x6c] sm:$0xf]
        %v373 = vld [vmem:[%s281 + $0x70] sm:$0xf]
        %v374 = vld [vmem:[%s281 + $0x74] sm:$0xf]
        %v375 = vld [vmem:[%s281 + $0x78] sm:$0xf]
        %v376 = vld [vmem:[%s281 + $0x7c] sm:$0xf]
        %v377 = vld [vmem:[%s333] sm:$0x1]
        %v379 = vlaneseq
        %v380 = vshrl.u32 %v379, 7
        %v381 = vsub.s32 0, %v380
        %v382 = vrot.slane %v377, %v381
        %v385 = vunpack.c.l.b16 %v344
        %v386 = vunpack.c.h.b16 %v344
        %v387 = vpack.c.b16 %v385, %v385
        %v388 = vpack.c.b16 %v386, %v386
        %v423 = vunpack.c.l.b16 %v345
        %v424 = vunpack.c.l.b16 %v346
        %v425 = vunpack.c.l.b16 %v347
        %v426 = vunpack.c.l.b16 %v348
        %v427 = vunpack.c.l.b16 %v349
        %v428 = vunpack.c.l.b16 %v350
        %v429 = vunpack.c.l.b16 %v351
        %v430 = vunpack.c.l.b16 %v352
        %v431 = vunpack.c.l.b16 %v353
        %v432 = vunpack.c.l.b16 %v354
        %v433 = vunpack.c.l.b16 %v355
        %v434 = vunpack.c.l.b16 %v356
        %v435 = vunpack.c.l.b16 %v357
        %v436 = vunpack.c.l.b16 %v358
        %v437 = vunpack.c.l.b16 %v359
        %v438 = vunpack.c.l.b16 %v360
        %v439 = vunpack.c.l.b16 %v361
        %v440 = vunpack.c.l.b16 %v362
        %v441 = vunpack.c.l.b16 %v363
        %v442 = vunpack.c.l.b16 %v364
        %v443 = vunpack.c.l.b16 %v365
        %v444 = vunpack.c.l.b16 %v366
        %v445 = vunpack.c.l.b16 %v367
        %v446 = vunpack.c.l.b16 %v368
        %v447 = vunpack.c.l.b16 %v369
        %v448 = vunpack.c.l.b16 %v370
        %v449 = vunpack.c.l.b16 %v371
        %v450 = vunpack.c.l.b16 %v372
        %v451 = vunpack.c.l.b16 %v373
        %v452 = vunpack.c.l.b16 %v374
        %v453 = vunpack.c.l.b16 %v375
        %v454 = vunpack.c.l.b16 %v376
        %v455 = vpack.c.b16 %v424, %v423
        %v456 = vpack.c.b16 %v426, %v425
        %v457 = vpack.c.b16 %v428, %v427
        %v458 = vpack.c.b16 %v430, %v429
        %v459 = vpack.c.b16 %v432, %v431
        %v460 = vpack.c.b16 %v434, %v433
        %v461 = vpack.c.b16 %v436, %v435
        %v462 = vpack.c.b16 %v438, %v437
        %v463 = vpack.c.b16 %v440, %v439
        %v464 = vpack.c.b16 %v442, %v441
        %v465 = vpack.c.b16 %v444, %v443
        %v466 = vpack.c.b16 %v446, %v445
        %v467 = vpack.c.b16 %v448, %v447
        %v468 = vpack.c.b16 %v450, %v449
        %v469 = vpack.c.b16 %v452, %v451
        %v470 = vpack.c.b16 %v454, %v453
        %487 = vmatprep.subr.bf16.mxu0 0
        %488 = vmatpush1.bf16.msra.mxu0 %v462
        %489 = vmatprep.subr.bf16.mxu0 0
        %490 = vmatpush1.bf16.msra.mxu0 %v461
        %491 = vmatprep.subr.bf16.mxu0 0
        %492 = vmatpush1.bf16.msra.mxu0 %v460
        %493 = vmatprep.subr.bf16.mxu0 0
        %494 = vmatpush1.bf16.msra.mxu0 %v459
        %495 = vmatprep.subr.bf16.mxu0 0
        %496 = vmatpush1.bf16.msra.mxu0 %v458
        %497 = vmatprep.subr.bf16.mxu0 0
        %498 = vmatpush1.bf16.msra.mxu0 %v457
        %499 = vmatprep.subr.bf16.mxu0 0
        %500 = vmatpush1.bf16.msra.mxu0 %v456
        %501 = vmatprep.subr.bf16.mxu0 0
        %502 = vmatpush1.bf16.msra.mxu0 %v455
        %503 = vmatprep.subr.bf16.mxu0 0
        %504 = vmatpush2.bf16.msra.mxu0 %v470
        %505 = vmatprep.subr.bf16.mxu0 0
        %506 = vmatpush2.bf16.msra.mxu0 %v469
        %507 = vmatprep.subr.bf16.mxu0 0
        %508 = vmatpush2.bf16.msra.mxu0 %v468
        %509 = vmatprep.subr.bf16.mxu0 0
        %510 = vmatpush2.bf16.msra.mxu0 %v467
        %511 = vmatprep.subr.bf16.mxu0 0
        %512 = vmatpush2.bf16.msra.mxu0 %v466
        %513 = vmatprep.subr.bf16.mxu0 0
        %514 = vmatpush2.bf16.msra.mxu0 %v465
        %515 = vmatprep.subr.bf16.mxu0 0
        %516 = vmatpush2.bf16.msra.mxu0 %v464
        %517 = vmatprep.subr.bf16.mxu0 0
        %518 = vmatpush2.bf16.msra.mxu0 %v463
        %519 = vmatprep.mubr.bf16.mxu0 %v388
        %520 = vmatmul.mubr.bf16.gmra.mxu0 %v387
        %v521 = vpop.f32.mrf.mxu0
        %v522 = vadd.f32 %v382, %v521
        %v523 = vpop.f32.mrf.mxu0
        %v524 = vpop.f32.mrf.mxu0
        %v525 = vpop.f32.mrf.mxu0
        %526 = vdwg.mxu0
        %v527 = vxor.u32 %v522, 2147483648
        %v528 = vmul.f32 %v527, 1.442695
        %v529 = vpow.pop %v528
        %v530 = vadd.f32 %v529, 1.0
        %v531 = vrcp.pop %v530
        %v532 = vmul.f32 1.0, %v531
        %s533 = smul.u32 %s28, 128
        %s534 = sshra.s32 %s533, 7
        %s535 = sand.u32 %s533, 127
        %s536 = smul.addr %s534, 4
        %s537 = scalar_lea.vmem %s0, %s536
        %v538 = vld [vmem:[%s537] sm:$0xf]
        %v539 = vunpack.c.l.bf16 %v538
        %v540 = vmul.f32 %v539, %v532
        %v541 = vpack.c.bf16 %v540, %v540
        %v542 = vld [vmem:[#allocation2] sm:$0xff]
        %v543 = vld [vmem:[%s290] sm:$0xf]
        %v544 = vld [vmem:[%s290 + $0x4] sm:$0xf]
        %v545 = vld [vmem:[%s290 + $0x8] sm:$0xf]
        %v546 = vld [vmem:[%s290 + $0xc] sm:$0xf]
        %v547 = vld [vmem:[%s290 + $0x10] sm:$0xf]
        %v548 = vld [vmem:[%s290 + $0x14] sm:$0xf]
        %v549 = vld [vmem:[%s290 + $0x18] sm:$0xf]
        %v550 = vld [vmem:[%s290 + $0x1c] sm:$0xf]
        %v551 = vld [vmem:[%s290 + $0x20] sm:$0xf]
        %v552 = vld [vmem:[%s290 + $0x24] sm:$0xf]
        %v553 = vld [vmem:[%s290 + $0x28] sm:$0xf]
        %v554 = vld [vmem:[%s290 + $0x2c] sm:$0xf]
        %v555 = vld [vmem:[%s290 + $0x30] sm:$0xf]
        %v556 = vld [vmem:[%s290 + $0x34] sm:$0xf]
        %v557 = vld [vmem:[%s290 + $0x38] sm:$0xf]
        %v558 = vld [vmem:[%s290 + $0x3c] sm:$0xf]
        %v575 = vunpack.c.l.b16 %v543
        %v576 = vunpack.c.l.b16 %v544
        %v577 = vunpack.c.l.b16 %v545
        %v578 = vunpack.c.l.b16 %v546
        %v579 = vunpack.c.l.b16 %v547
        %v580 = vunpack.c.l.b16 %v548
        %v581 = vunpack.c.l.b16 %v549
        %v582 = vunpack.c.l.b16 %v550
        %v583 = vunpack.c.l.b16 %v551
        %v584 = vunpack.c.l.b16 %v552
        %v585 = vunpack.c.l.b16 %v553
        %v586 = vunpack.c.l.b16 %v554
        %v587 = vunpack.c.l.b16 %v555
        %v588 = vunpack.c.l.b16 %v556
        %v589 = vunpack.c.l.b16 %v557
        %v590 = vunpack.c.l.b16 %v558
        %v591 = vpack.c.b16 %v576, %v575
        %v592 = vpack.c.b16 %v578, %v577
        %v593 = vpack.c.b16 %v580, %v579
        %v594 = vpack.c.b16 %v582, %v581
        %v595 = vpack.c.b16 %v584, %v583
        %v596 = vpack.c.b16 %v586, %v585
        %v597 = vpack.c.b16 %v588, %v587
        %v598 = vpack.c.b16 %v590, %v589
        %607 = vmatprep.subr.bf16.mxu0 0
        %608 = vmatpush1.bf16.msra.mxu0 %v598
        %609 = vmatprep.subr.bf16.mxu0 0
        %610 = vmatpush1.bf16.msra.mxu0 %v597
        %611 = vmatprep.subr.bf16.mxu0 0
        %612 = vmatpush1.bf16.msra.mxu0 %v596
        %613 = vmatprep.subr.bf16.mxu0 0
        %614 = vmatpush1.bf16.msra.mxu0 %v595
        %615 = vmatprep.subr.bf16.mxu0 0
        %616 = vmatpush1.bf16.msra.mxu0 %v594
        %617 = vmatprep.subr.bf16.mxu0 0
        %618 = vmatpush1.bf16.msra.mxu0 %v593
        %619 = vmatprep.subr.bf16.mxu0 0
        %620 = vmatpush1.bf16.msra.mxu0 %v592
        %621 = vmatprep.subr.bf16.mxu0 0
        %622 = vmatpush1.bf16.msra.mxu0 %v591
        %623 = vmatprep.subr.bf16.mxu0 0
        %624 = vmatpush2.bf16.msra.mxu0 0
        %625 = vmatprep.subr.bf16.mxu0 0
        %626 = vmatpush2.bf16.msra.mxu0 0
        %627 = vmatprep.subr.bf16.mxu0 0
        %628 = vmatpush2.bf16.msra.mxu0 0
        %629 = vmatprep.subr.bf16.mxu0 0
        %630 = vmatpush2.bf16.msra.mxu0 0
        %631 = vmatprep.subr.bf16.mxu0 0
        %632 = vmatpush2.bf16.msra.mxu0 0
        %633 = vmatprep.subr.bf16.mxu0 0
        %634 = vmatpush2.bf16.msra.mxu0 0
        %635 = vmatprep.subr.bf16.mxu0 0
        %636 = vmatpush2.bf16.msra.mxu0 0
        %637 = vmatprep.subr.bf16.mxu0 0
        %638 = vmatpush2.bf16.msra.mxu0 0
        %639 = vmatprep.mubr.bf16.mxu0 0
        %640 = vmatmul.mubr.bf16.gmra.mxu0 %v541
        %v641 = vpop.f32.mrf.mxu0
        %v642 = vadd.f32 0.0, %v641
        %v643 = vpop.f32.mrf.mxu0
        %v644 = vpop.f32.mrf.mxu0
        %v645 = vpop.f32.mrf.mxu0
        %646 = vdwg.mxu0
        %v647 = vadd.f32 %v542, %v642
        %648 = vst [vmem:[#allocation2] sm:$0xff] %v647
        %p649 = scmp.eq.s32.totalorder %s28, 1
        // Predicated region
        $region53: #{_gated_heads.1} parent=39 // pred_check
          %p650 = pneg %p649
        $region54: #{_gated_heads.1} parent=39 // pred_check_branch
          %652 = sbr.rel (%p650) target = $region56
        $region55: #{_gated_heads.1} parent=39 // pred_region
          %v653 = vld [vmem:[#allocation2] sm:$0xff]
          %v654 = vld [vmem:[%s337] sm:$0x1]
          %v656 = vlaneseq
          %v657 = vshrl.u32 %v656, 7
          %v658 = vsub.s32 0, %v657
          %v659 = vrot.slane %v654, %v658
          %v661 = vadd.f32 %v653, %v659
          %662 = vst [vmem:[#allocation8] sm:$0xff] %v661
        $region56: #{_gated_heads.1} parent=39 // pred_fallthru
          _
        // Predicated region
        $region57: #{_gated_heads.1} parent=39 // pred_check
          %p663 = pneg %p184
        $region58: #{_gated_heads.1} parent=39 // pred_check_branch
          %665 = sbr.rel (%p663) target = $region60
        $region59: #{_gated_heads.1} parent=39 // pred_region
          %s667 = ssub.s32 128, 128
          %668 = vsyncadd [#allocation5], %s667
          %s669 = smul.addr %s27, 128
          %s670 = scalar_lea.hbm %s5, %s669
          %s672 = sshll.u32 [#allocation8], 4
          %s673 = int_to_ptr.vmem [resolvable:$true] %s672
          %675 = dma.vmem_to_hbm [thread:$0]  %s673, 128, %s670, [#allocation5]
        $region60: #{_gated_heads.1} parent=39 // pred_fallthru
          _
        // Predicated region
        $region61: #{_gated_heads.1} parent=39 // pred_check
          %p676 = pneg %p184
        $region62: #{_gated_heads.1} parent=39 // pred_check_branch
          %678 = sbr.rel (%p676) target = $region64
        $region63: #{_gated_heads.1} parent=39 // pred_region
          %679 = dma.done [#allocation5], 128
        $region64: #{_gated_heads.1} parent=39 // pred_fallthru
          _
      $region40: #{_gated_heads.1} parent=5 // pred_fallthru
        _
      %p680 = scmp.le.s32.totalorder 2, %s18
      // Predicated region
      $region65: #{_gated_heads.1} parent=5 // pred_check
        %p681 = pneg %p680
      $region66: #{_gated_heads.1} parent=5 // pred_check_branch
        %683 = sbr.rel (%p681) target = $region68
      $region67: #{_gated_heads.1} parent=5 // pred_region
        %s684 = ssub.s32 %s18, 2
      $region68: #{_gated_heads.1} parent=5 // pred_fallthru
        _
    $region6: #{_gated_heads.1} parent=1 // loop_footer
      %s22 = sadd.s32 1, %s18
    $region7: #{_gated_heads.1} parent=1 // loop_footer_branch
      %17 = sbr.rel target = $region3
    $region8: #{_gated_heads.1} parent=1 // loop_exit
      _
    %685 = vsyncpa [#allocation4], 1
    %s686 = scalar_lea.sflag [#allocation4], 1
    %687 = vsyncpa %s686, 1
    %688 = vsyncpa [#allocation7], 1
    %s689 = scalar_lea.sflag [#allocation7], 1
    %690 = vsyncpa %s689, 1
    %691 = vsyncpa [#allocation5], 1
    %s692 = scalar_lea.sflag [#allocation5], 1
    %693 = vsyncpa %s692, 1

</llo_original>
